<compile_context>
chip_gen: v7x
topology: tpu7x:2x2x1
jax: 0.10.0
libtpu: 0.0.40
codegen_flags: <defaults>
</compile_context>

<pallas_src>
import functools

import jax
import jax.numpy as jnp
from jax.experimental import pallas as pl
from jax.experimental.pallas import tpu as pltpu


def _round_up(x, m):
    return ((x + m - 1) // m) * m


def _generator_kernel(x_ref, w1_ref, b1_ref, w2_ref, b2_ref,
                      w3_ref, b3_ref, w4_ref, b4_ref, o_ref):
    """Fused 4-layer MLP: (relu o fc)^3 followed by tanh o fc."""
    x = x_ref[...].astype(jnp.bfloat16)

    h = jnp.dot(x, w1_ref[...], preferred_element_type=jnp.float32) + b1_ref[...]
    h = jnp.maximum(h, 0.0)

    h = jnp.dot(h.astype(jnp.bfloat16), w2_ref[...],
                preferred_element_type=jnp.float32) + b2_ref[...]
    h = jnp.maximum(h, 0.0)

    h = jnp.dot(h.astype(jnp.bfloat16), w3_ref[...],
                preferred_element_type=jnp.float32) + b3_ref[...]
    h = jnp.maximum(h, 0.0)

    h = jnp.dot(h.astype(jnp.bfloat16), w4_ref[...],
                preferred_element_type=jnp.float32) + b4_ref[...]
    o_ref[...] = jnp.tanh(h).astype(o_ref.dtype)


@functools.partial(jax.jit, static_argnames=("block_b",))
def generator_forward(x, params, block_b=256):
    """Run the fused generator MLP.

    x: [B, latent_dim] float32 (any B; padded internally to a tile multiple)
    params: dict with w1..w4 ([in, out]) and b1..b4 ([1, out]), float32
    """
    B, latent_dim = x.shape
    out_dim = params["w4"].shape[1]

    # Lane-dense output width (multiple of 128) -> unmasked full-lane stores.
    out_pad = _round_up(out_dim, 128)

    # Adaptive batch tile: never larger than the (sublane-rounded) batch, so
    # small batches don't burn MXU cycles on padding rows; capped at block_b
    # for large batches so per-tile VMEM and DMA sizes stay bounded.
    tile_b = min(_round_up(block_b, 8), _round_up(B, 8))
    b_pad = _round_up(B, tile_b)

    # bf16 weights (MXU fast path, half the weight VMEM/DMA); f32 biases.
    w1 = params["w1"].astype(jnp.bfloat16)
    w2 = params["w2"].astype(jnp.bfloat16)
    w3 = params["w3"].astype(jnp.bfloat16)
    w4 = params["w4"].astype(jnp.bfloat16)
    b1 = params["b1"].astype(jnp.float32)
    b2 = params["b2"].astype(jnp.float32)
    b3 = params["b3"].astype(jnp.float32)
    b4 = params["b4"].astype(jnp.float32)

    if out_pad != out_dim:
        w4 = jnp.pad(w4, ((0, 0), (0, out_pad - out_dim)))
        b4 = jnp.pad(b4, ((0, 0), (0, out_pad - out_dim)))
    xp = x if b_pad == B else jnp.pad(x, ((0, b_pad - B), (0, 0)))

    # Constant index_map -> weights/biases DMA'd once, reused across tiles.
    full = lambda arr: pl.BlockSpec(arr.shape, lambda i: (0, 0))

    out = pl.pallas_call(
        _generator_kernel,
        out_shape=jax.ShapeDtypeStruct((b_pad, out_pad), x.dtype),
        grid_spec=pltpu.PrefetchScalarGridSpec(
            num_scalar_prefetch=0,
            grid=(b_pad // tile_b,),
            in_specs=[
                pl.BlockSpec((tile_b, latent_dim), lambda i: (i, 0)),  # x tile
                full(w1), full(b1),
                full(w2), full(b2),
                full(w3), full(b3),
                full(w4), full(b4),
            ],
            out_specs=pl.BlockSpec((tile_b, out_pad), lambda i: (i, 0)),
        ),
        compiler_params=pltpu.CompilerParams(
            # Batch axis is embarrassingly parallel -> megacore sharding on v7x.
            dimension_semantics=("parallel",),
        ),
    )(xp, w1, b1, w2, b2, w3, b3, w4, b4)

    return out[:B, :out_dim]


def init_generator_params(key, latent_dim, output_dim):
    """Deterministic parameter init matching nn.Linear shapes.

    PyTorch nn.Linear(in, out) has weight [out, in]; we store the transpose
    [in, out] so the kernel does x @ W. Biases are kept as [1, out] so they
    broadcast cleanly in 2-D vreg layout.
    """
    dims = [(latent_dim, 128), (128, 256), (256, 512), (512, output_dim)]
    params = {}
    for idx, (fan_in, fan_out) in enumerate(dims, start=1):
        key, kw, kb = jax.random.split(key, 3)
        bound = 1.0 / (fan_in ** 0.5)
        params[f"w{idx}"] = jax.random.uniform(
            kw, (fan_in, fan_out), jnp.float32, minval=-bound, maxval=bound)
        params[f"b{idx}"] = jax.random.uniform(
            kb, (1, fan_out), jnp.float32, minval=-bound, maxval=bound)
    return params


def _reference_forward(x, params):
    """Pure-JAX reference with the same bf16-in / f32-accumulate math."""
    def layer(h, w, b):
        return jnp.dot(h.astype(jnp.bfloat16), w.astype(jnp.bfloat16),
                       preferred_element_type=jnp.float32) + b
    h = jnp.maximum(layer(x, params["w1"], params["b1"]), 0.0)
    h = jnp.maximum(layer(h, params["w2"], params["b2"]), 0.0)
    h = jnp.maximum(layer(h, params["w3"], params["b3"]), 0.0)
    return jnp.tanh(layer(h, params["w4"], params["b4"]))


if __name__ == "__main__":
    latent_dim = 32
    output_dim = 64
    batch = 8  # small demo batch; wrapper picks an 8-row tile (no dead padding)

    key = jax.random.PRNGKey(0)
    key, kx = jax.random.split(key)
    x = jax.random.normal(kx, (batch, latent_dim), jnp.float32)
    params = init_generator_params(key, latent_dim, output_dim)

    out = generator_forward(x, params)
    out = jax.block_until_ready(out)

    ref = _reference_forward(x, params)
    assert out.shape == (batch, output_dim)
    assert jnp.allclose(out, ref, atol=2e-2, rtol=2e-2), "mismatch vs JAX reference"

    print("KERNEL_OK")
</pallas_src>

<mosaic_0001>
module attributes {stable_mosaic.version = 11 : i64} {
  func.func @_generator_kernel(%arg0: i32, %arg1: memref<8x32xf32, #tpu.memory_space<vmem>>, %arg2: memref<32x128xbf16, #tpu.memory_space<vmem>>, %arg3: memref<1x128xf32, #tpu.memory_space<vmem>>, %arg4: memref<128x256xbf16, #tpu.memory_space<vmem>>, %arg5: memref<1x256xf32, #tpu.memory_space<vmem>>, %arg6: memref<256x512xbf16, #tpu.memory_space<vmem>>, %arg7: memref<1x512xf32, #tpu.memory_space<vmem>>, %arg8: memref<512x128xbf16, #tpu.memory_space<vmem>>, %arg9: memref<1x128xf32, #tpu.memory_space<vmem>>, %arg10: memref<8x128xf32, #tpu.memory_space<vmem>>) attributes {dimension_semantics = [#tpu.dimension_semantics<parallel>], iteration_bounds = array<i64: 1>, scalar_prefetch = 0 : i64, scratch_operands = 0 : i64, tpu.core_type = #tpu.core_type<tc>, window_params = [{transform_indices = @transform_0, window_bounds = array<i64: 8, 32>}, {pipeline_mode = #tpu.pipeline_mode<synchronous>, transform_indices = @transform_1, window_bounds = array<i64: 32, 128>}, {pipeline_mode = #tpu.pipeline_mode<synchronous>, transform_indices = @transform_2, window_bounds = array<i64: 1, 128>}, {pipeline_mode = #tpu.pipeline_mode<synchronous>, transform_indices = @transform_3, window_bounds = array<i64: 128, 256>}, {pipeline_mode = #tpu.pipeline_mode<synchronous>, transform_indices = @transform_4, window_bounds = array<i64: 1, 256>}, {pipeline_mode = #tpu.pipeline_mode<synchronous>, transform_indices = @transform_5, window_bounds = array<i64: 256, 512>}, {pipeline_mode = #tpu.pipeline_mode<synchronous>, transform_indices = @transform_6, window_bounds = array<i64: 1, 512>}, {pipeline_mode = #tpu.pipeline_mode<synchronous>, transform_indices = @transform_7, window_bounds = array<i64: 512, 128>}, {pipeline_mode = #tpu.pipeline_mode<synchronous>, transform_indices = @transform_8, window_bounds = array<i64: 1, 128>}, {transform_indices = @transform_9, window_bounds = array<i64: 8, 128>}]} {
    %c0 = arith.constant 0 : index
    %c0_0 = arith.constant 0 : index
    %0 = vector.load %arg1[%c0, %c0_0] : memref<8x32xf32, #tpu.memory_space<vmem>>, vector<8x32xf32>
    %1 = arith.truncf %0 : vector<8x32xf32> to vector<8x32xbf16>
    %c0_1 = arith.constant 0 : index
    %c0_2 = arith.constant 0 : index
    %2 = vector.load %arg2[%c0_1, %c0_2] : memref<32x128xbf16, #tpu.memory_space<vmem>>, vector<32x128xbf16>
    %cst = arith.constant dense<0.000000e+00> : vector<8x128xf32>
    %3 = tpu.matmul %1, %2, %cst {dimension_numbers = #tpu.dot_dimension_numbers<[1], [0], [0], [1], [0, 0, 1, 1], [], []>} : vector<8x32xbf16>, vector<32x128xbf16>, vector<8x128xf32> -> vector<8x128xf32>
    %c0_3 = arith.constant 0 : index
    %c0_4 = arith.constant 0 : index
    %4 = vector.load %arg3[%c0_3, %c0_4] : memref<1x128xf32, #tpu.memory_space<vmem>>, vector<1x128xf32>
    %5 = vector.broadcast %4 : vector<1x128xf32> to vector<8x128xf32>
    %6 = arith.addf %3, %5 : vector<8x128xf32>
    %cst_5 = arith.constant 0.000000e+00 : f32
    %7 = vector.broadcast %cst_5 : f32 to vector<8x128xf32>
    %8 = arith.maximumf %6, %7 : vector<8x128xf32>
    %9 = arith.truncf %8 : vector<8x128xf32> to vector<8x128xbf16>
    %c0_6 = arith.constant 0 : index
    %c0_7 = arith.constant 0 : index
    %10 = vector.load %arg4[%c0_6, %c0_7] : memref<128x256xbf16, #tpu.memory_space<vmem>>, vector<128x256xbf16>
    %cst_8 = arith.constant dense<0.000000e+00> : vector<8x256xf32>
    %11 = tpu.matmul %9, %10, %cst_8 {dimension_numbers = #tpu.dot_dimension_numbers<[1], [0], [0], [1], [0, 0, 1, 1], [], []>} : vector<8x128xbf16>, vector<128x256xbf16>, vector<8x256xf32> -> vector<8x256xf32>
    %c0_9 = arith.constant 0 : index
    %c0_10 = arith.constant 0 : index
    %12 = vector.load %arg5[%c0_9, %c0_10] : memref<1x256xf32, #tpu.memory_space<vmem>>, vector<1x256xf32>
    %13 = vector.broadcast %12 : vector<1x256xf32> to vector<8x256xf32>
    %14 = arith.addf %11, %13 : vector<8x256xf32>
    %cst_11 = arith.constant 0.000000e+00 : f32
    %15 = vector.broadcast %cst_11 : f32 to vector<8x256xf32>
    %16 = arith.maximumf %14, %15 : vector<8x256xf32>
    %17 = arith.truncf %16 : vector<8x256xf32> to vector<8x256xbf16>
    %c0_12 = arith.constant 0 : index
    %c0_13 = arith.constant 0 : index
    %18 = vector.load %arg6[%c0_12, %c0_13] : memref<256x512xbf16, #tpu.memory_space<vmem>>, vector<256x512xbf16>
    %cst_14 = arith.constant dense<0.000000e+00> : vector<8x512xf32>
    %19 = tpu.matmul %17, %18, %cst_14 {dimension_numbers = #tpu.dot_dimension_numbers<[1], [0], [0], [1], [0, 0, 1, 1], [], []>} : vector<8x256xbf16>, vector<256x512xbf16>, vector<8x512xf32> -> vector<8x512xf32>
    %c0_15 = arith.constant 0 : index
    %c0_16 = arith.constant 0 : index
    %20 = vector.load %arg7[%c0_15, %c0_16] : memref<1x512xf32, #tpu.memory_space<vmem>>, vector<1x512xf32>
    %21 = vector.broadcast %20 : vector<1x512xf32> to vector<8x512xf32>
    %22 = arith.addf %19, %21 : vector<8x512xf32>
    %cst_17 = arith.constant 0.000000e+00 : f32
    %23 = vector.broadcast %cst_17 : f32 to vector<8x512xf32>
    %24 = arith.maximumf %22, %23 : vector<8x512xf32>
    %25 = arith.truncf %24 : vector<8x512xf32> to vector<8x512xbf16>
    %c0_18 = arith.constant 0 : index
    %c0_19 = arith.constant 0 : index
    %26 = vector.load %arg8[%c0_18, %c0_19] : memref<512x128xbf16, #tpu.memory_space<vmem>>, vector<512x128xbf16>
    %cst_20 = arith.constant dense<0.000000e+00> : vector<8x128xf32>
    %27 = tpu.matmul %25, %26, %cst_20 {dimension_numbers = #tpu.dot_dimension_numbers<[1], [0], [0], [1], [0, 0, 1, 1], [], []>} : vector<8x512xbf16>, vector<512x128xbf16>, vector<8x128xf32> -> vector<8x128xf32>
    %c0_21 = arith.constant 0 : index
    %c0_22 = arith.constant 0 : index
    %28 = vector.load %arg9[%c0_21, %c0_22] : memref<1x128xf32, #tpu.memory_space<vmem>>, vector<1x128xf32>
    %29 = vector.broadcast %28 : vector<1x128xf32> to vector<8x128xf32>
    %30 = arith.addf %27, %29 : vector<8x128xf32>
    %31 = math.tanh %30 : vector<8x128xf32>
    %c0_23 = arith.constant 0 : index
    %c0_24 = arith.constant 0 : index
    %32 = vector.load %arg10[%c0_23, %c0_24] : memref<8x128xf32, #tpu.memory_space<vmem>>, vector<8x128xf32>
    tpu.vector_store %arg10[%c0_23, %c0_24], %31 {strides = array<i32>} : memref<8x128xf32, #tpu.memory_space<vmem>>, vector<8x128xf32>,
    return
  }
  func.func @transform_0(%arg0: i32) -> (i32, i32) {
    %c0_i32 = arith.constant 0 : i32
    %c0_i32_0 = arith.constant 0 : i32
    return %arg0, %c0_i32 : i32, i32
  }
  func.func @transform_1(%arg0: i32) -> (i32, i32) {
    %c0_i32 = arith.constant 0 : i32
    %c0_i32_0 = arith.constant 0 : i32
    %c0_i32_1 = arith.constant 0 : i32
    return %c0_i32, %c0_i32_0 : i32, i32
  }
  func.func @transform_2(%arg0: i32) -> (i32, i32) {
    %c0_i32 = arith.constant 0 : i32
    %c0_i32_0 = arith.constant 0 : i32
    %c0_i32_1 = arith.constant 0 : i32
    return %c0_i32, %c0_i32_0 : i32, i32
  }
  func.func @transform_3(%arg0: i32) -> (i32, i32) {
    %c0_i32 = arith.constant 0 : i32
    %c0_i32_0 = arith.constant 0 : i32
    %c0_i32_1 = arith.constant 0 : i32
    return %c0_i32, %c0_i32_0 : i32, i32
  }
  func.func @transform_4(%arg0: i32) -> (i32, i32) {
    %c0_i32 = arith.constant 0 : i32
    %c0_i32_0 = arith.constant 0 : i32
    %c0_i32_1 = arith.constant 0 : i32
    return %c0_i32, %c0_i32_0 : i32, i32
  }
  func.func @transform_5(%arg0: i32) -> (i32, i32) {
    %c0_i32 = arith.constant 0 : i32
    %c0_i32_0 = arith.constant 0 : i32
    %c0_i32_1 = arith.constant 0 : i32
    return %c0_i32, %c0_i32_0 : i32, i32
  }
  func.func @transform_6(%arg0: i32) -> (i32, i32) {
    %c0_i32 = arith.constant 0 : i32
    %c0_i32_0 = arith.constant 0 : i32
    %c0_i32_1 = arith.constant 0 : i32
    return %c0_i32, %c0_i32_0 : i32, i32
  }
  func.func @transform_7(%arg0: i32) -> (i32, i32) {
    %c0_i32 = arith.constant 0 : i32
    %c0_i32_0 = arith.constant 0 : i32
    %c0_i32_1 = arith.constant 0 : i32
    return %c0_i32, %c0_i32_0 : i32, i32
  }
  func.func @transform_8(%arg0: i32) -> (i32, i32) {
    %c0_i32 = arith.constant 0 : i32
    %c0_i32_0 = arith.constant 0 : i32
    %c0_i32_1 = arith.constant 0 : i32
    return %c0_i32, %c0_i32_0 : i32, i32
  }
  func.func @transform_9(%arg0: i32) -> (i32, i32) {
    %c0_i32 = arith.constant 0 : i32
    %c0_i32_0 = arith.constant 0 : i32
    return %arg0, %c0_i32 : i32, i32
  }
}

</mosaic_0001>

<llo_original>
// kernel: generator_forward.1
$region0: #{generator_forward.1}
  #allocation0 [shape = 'u32[]', space=smem, size = 0x4, offset = 0x4, fixed_abs, tag = 'smem constant byte address 0x4 - core index']
  #allocation1 [shape = 'u32[144,128]{1,0:T(1,128)}', space=vmem, size = 0x12000, scoped, tag = 'internal scratch']
  %s0 = inlined_call_operand.vmem [shape: f32[8,32], index: 0, kind: input, shape index: {}]
  %s1 = inlined_call_operand.vmem [shape: bf16[32,128], index: 1, kind: input, shape index: {}]
  %s2 = inlined_call_operand.vmem [shape: f32[1,128], index: 2, kind: input, shape index: {}]
  %s3 = inlined_call_operand.vmem [shape: bf16[128,256], index: 3, kind: input, shape index: {}]
  %s4 = inlined_call_operand.vmem [shape: f32[1,256], index: 4, kind: input, shape index: {}]
  %s5 = inlined_call_operand.vmem [shape: bf16[256,512], index: 5, kind: input, shape index: {}]
  %s6 = inlined_call_operand.vmem [shape: f32[1,512], index: 6, kind: input, shape index: {}]
  %s7 = inlined_call_operand.vmem [shape: bf16[512,128], index: 7, kind: input, shape index: {}]
  %s8 = inlined_call_operand.vmem [shape: f32[1,128], index: 8, kind: input, shape index: {}]
  %s9 = inlined_call_operand.hbm [shape: f32[8,128], index: 9, kind: output, shape index: {}]
  %s10 = sld [smem:[#allocation0]]
  $region46: #{generator_forward.1} parent=0
    _
  %s12 = ssub.s32 1, %s10
  %s13 = scalar_select 0, %s12, %s10
  $region1: #{generator_forward.1} parent=0
    #allocation2 [shape = 'u8[4096]{0}', space=vmem, size = 0x1000, scoped, tag = 'output window, operand 0, single buffered']
    #allocation3 [shape = 's32[1]{0}', space=sflag, size = 0x4, scoped, tag = 'scoped memory for generator_forward.1']
    %14 = vsyncpa [#allocation3], 0
    // Predicated region
    $region2: #{generator_forward.1} parent=1 // pred_check
      _
    $region3: #{generator_forward.1} parent=1 // pred_check_branch
      %16 = sbr.rel (0) target = $region5
    $region4: #{generator_forward.1} parent=1 // pred_region
      _
    $region5: #{generator_forward.1} parent=1 // pred_fallthru
      _
    // Predicated region
    $region6: #{generator_forward.1} parent=1 // pred_check
      _
    $region7: #{generator_forward.1} parent=1 // pred_check_branch
      %18 = sbr.rel (0) target = $region9
    $region8: #{generator_forward.1} parent=1 // pred_region
      _
    $region9: #{generator_forward.1} parent=1 // pred_fallthru
      _
    // Predicated region
    $region10: #{generator_forward.1} parent=1 // pred_check
      _
    $region11: #{generator_forward.1} parent=1 // pred_check_branch
      %20 = sbr.rel (0) target = $region13
    $region12: #{generator_forward.1} parent=1 // pred_region
      _
    $region13: #{generator_forward.1} parent=1 // pred_fallthru
      _
    // Predicated region
    $region14: #{generator_forward.1} parent=1 // pred_check
      _
    $region15: #{generator_forward.1} parent=1 // pred_check_branch
      %22 = sbr.rel (0) target = $region17
    $region16: #{generator_forward.1} parent=1 // pred_region
      _
    $region17: #{generator_forward.1} parent=1 // pred_fallthru
      _
    // Predicated region
    $region18: #{generator_forward.1} parent=1 // pred_check
      _
    $region19: #{generator_forward.1} parent=1 // pred_check_branch
      %24 = sbr.rel (0) target = $region21
    $region20: #{generator_forward.1} parent=1 // pred_region
      _
    $region21: #{generator_forward.1} parent=1 // pred_fallthru
      _
    // Predicated region
    $region22: #{generator_forward.1} parent=1 // pred_check
      _
    $region23: #{generator_forward.1} parent=1 // pred_check_branch
      %26 = sbr.rel (0) target = $region25
    $region24: #{generator_forward.1} parent=1 // pred_region
      _
    $region25: #{generator_forward.1} parent=1 // pred_fallthru
      _
    // Predicated region
    $region26: #{generator_forward.1} parent=1 // pred_check
      _
    $region27: #{generator_forward.1} parent=1 // pred_check_branch
      %28 = sbr.rel (0) target = $region29
    $region28: #{generator_forward.1} parent=1 // pred_region
      _
    $region29: #{generator_forward.1} parent=1 // pred_fallthru
      _
    // Predicated region
    $region30: #{generator_forward.1} parent=1 // pred_check
      _
    $region31: #{generator_forward.1} parent=1 // pred_check_branch
      %30 = sbr.rel (0) target = $region33
    $region32: #{generator_forward.1} parent=1 // pred_region
      _
    $region33: #{generator_forward.1} parent=1 // pred_fallthru
      _
    // Predicated region
    $region34: #{generator_forward.1} parent=1 // pred_check
      _
    $region35: #{generator_forward.1} parent=1 // pred_check_branch
      %32 = sbr.rel (0) target = $region37
    $region36: #{generator_forward.1} parent=1 // pred_region
      _
    $region37: #{generator_forward.1} parent=1 // pred_fallthru
      _
    %v34 = vld [vmem:[%s0] sm:$0xff]
    %v35 = vpack.c.bf16 %v34, %v34
    %v36 = vld [vmem:[%s1] sm:$0xf]
    %v37 = vld [vmem:[%s1 + $0x4] sm:$0xf]
    %v38 = vld [vmem:[%s1 + $0x8] sm:$0xf]
    %v39 = vld [vmem:[%s1 + $0xc] sm:$0xf]
    %v40 = vld [vmem:[%s2] sm:$0x1]
    %v42 = vlaneseq
    %v43 = vshrl.u32 %v42, 7
    %v44 = vsub.s32 0, %v43
    %v45 = vrot.slane %v40, %v44
    %v51 = vunpack.c.l.b16 %v36
    %v52 = vunpack.c.l.b16 %v37
    %v53 = vunpack.c.l.b16 %v38
    %v54 = vunpack.c.l.b16 %v39
    %v55 = vpack.c.b16 %v52, %v51
    %v56 = vpack.c.b16 %v54, %v53
    %vm59 = vcmask 261120
    %v61 = vsel %vm59, %v35, 0
    %63 = vmatprep.subr.bf16.mxu0 0
    %64 = vmatpush1.bf16.msra.mxu0 %v55
    %65 = vmatprep.subr.bf16.mxu0 0
    %66 = vmatpush1.bf16.msra.mxu0 %v56
    %67 = vmatprep.subr.bf16.mxu0 0
    %68 = vmatpush1.bf16.msra.mxu0 0
    %69 = vmatprep.subr.bf16.mxu0 0
    %70 = vmatpush1.bf16.msra.mxu0 0
    %71 = vmatprep.subr.bf16.mxu0 0
    %72 = vmatpush1.bf16.msra.mxu0 0
    %73 = vmatprep.subr.bf16.mxu0 0
    %74 = vmatpush1.bf16.msra.mxu0 0
    %75 = vmatprep.subr.bf16.mxu0 0
    %76 = vmatpush1.bf16.msra.mxu0 0
    %77 = vmatprep.subr.bf16.mxu0 0
    %78 = vmatpush1.bf16.msra.mxu0 0
    %79 = vmatprep.subr.bf16.mxu0 0
    %80 = vmatpush1.bf16.msra.mxu0 0
    %81 = vmatprep.subr.bf16.mxu0 0
    %82 = vmatpush1.bf16.msra.mxu0 0
    %83 = vmatprep.subr.bf16.mxu0 0
    %84 = vmatpush1.bf16.msra.mxu0 0
    %85 = vmatprep.subr.bf16.mxu0 0
    %86 = vmatpush1.bf16.msra.mxu0 0
    %87 = vmatprep.subr.bf16.mxu0 0
    %88 = vmatpush1.bf16.msra.mxu0 0
    %89 = vmatprep.subr.bf16.mxu0 0
    %90 = vmatpush1.bf16.msra.mxu0 0
    %91 = vmatprep.subr.bf16.mxu0 0
    %92 = vmatpush1.bf16.msra.mxu0 0
    %93 = vmatprep.subr.bf16.mxu0 0
    %94 = vmatpush1.bf16.msra.mxu0 0
    %95 = vmatprep.mubr.bf16.mxu0 0
    %96 = vmatmul.mubr.bf16.gmra.mrb[0].mxu0 %v61
    %v97 = vpop.f32.mrb[0].mxu0
    %v98 = vadd.f32 %v45, %v97
    %v99 = vpop.f32.mrb[0].mxu0
    %v100 = vpop.f32.mrb[0].mxu0
    %v101 = vpop.f32.mrb[0].mxu0
    %102 = vdwg.mxu0
    %v103 = vmax.f32 %v98, 0.0
    %v104 = vpack.c.bf16 %v103, %v103
    %v105 = vld [vmem:[%s3] sm:$0xff]
    %v106 = vld [vmem:[%s3 + $0x8] sm:$0xff]
    %v107 = vld [vmem:[%s3 + $0x10] sm:$0xff]
    %v108 = vld [vmem:[%s3 + $0x18] sm:$0xff]
    %v109 = vld [vmem:[%s3 + $0x20] sm:$0xff]
    %v110 = vld [vmem:[%s3 + $0x28] sm:$0xff]
    %v111 = vld [vmem:[%s3 + $0x30] sm:$0xff]
    %v112 = vld [vmem:[%s3 + $0x38] sm:$0xff]
    %v113 = vld [vmem:[%s3 + $0x40] sm:$0xff]
    %v114 = vld [vmem:[%s3 + $0x48] sm:$0xff]
    %v115 = vld [vmem:[%s3 + $0x50] sm:$0xff]
    %v116 = vld [vmem:[%s3 + $0x58] sm:$0xff]
    %v117 = vld [vmem:[%s3 + $0x60] sm:$0xff]
    %v118 = vld [vmem:[%s3 + $0x68] sm:$0xff]
    %v119 = vld [vmem:[%s3 + $0x70] sm:$0xff]
    %v120 = vld [vmem:[%s3 + $0x78] sm:$0xff]
    %v121 = vld [vmem:[%s4] sm:$0x3]
    %v123 = vlaneseq
    %v124 = vshrl.u32 %v123, 7
    %v125 = vsub.s32 0, %v124
    %v126 = vrot.slane %v121, %v125
    %v127 = vlaneseq
    %v128 = vshrl.u32 %v127, 7
    %v129 = vsub.s32 1, %v128
    %v130 = vrot.slane %v121, %v129
    %v149 = vunpack.c.l.b16 %v105
    %v150 = vunpack.c.h.b16 %v105
    %v151 = vunpack.c.l.b16 %v106
    %v152 = vunpack.c.h.b16 %v106
    %v153 = vunpack.c.l.b16 %v107
    %v154 = vunpack.c.h.b16 %v107
    %v155 = vunpack.c.l.b16 %v108
    %v156 = vunpack.c.h.b16 %v108
    %v157 = vunpack.c.l.b16 %v109
    %v158 = vunpack.c.h.b16 %v109
    %v159 = vunpack.c.l.b16 %v110
    %v160 = vunpack.c.h.b16 %v110
    %v161 = vunpack.c.l.b16 %v111
    %v162 = vunpack.c.h.b16 %v111
    %v163 = vunpack.c.l.b16 %v112
    %v164 = vunpack.c.h.b16 %v112
    %v165 = vunpack.c.l.b16 %v113
    %v166 = vunpack.c.h.b16 %v113
    %v167 = vunpack.c.l.b16 %v114
    %v168 = vunpack.c.h.b16 %v114
    %v169 = vunpack.c.l.b16 %v115
    %v170 = vunpack.c.h.b16 %v115
    %v171 = vunpack.c.l.b16 %v116
    %v172 = vunpack.c.h.b16 %v116
    %v173 = vunpack.c.l.b16 %v117
    %v174 = vunpack.c.h.b16 %v117
    %v175 = vunpack.c.l.b16 %v118
    %v176 = vunpack.c.h.b16 %v118
    %v177 = vunpack.c.l.b16 %v119
    %v178 = vunpack.c.h.b16 %v119
    %v179 = vunpack.c.l.b16 %v120
    %v180 = vunpack.c.h.b16 %v120
    %v181 = vpack.c.b16 %v151, %v149
    %v182 = vpack.c.b16 %v152, %v150
    %v183 = vpack.c.b16 %v155, %v153
    %v184 = vpack.c.b16 %v156, %v154
    %v185 = vpack.c.b16 %v159, %v157
    %v186 = vpack.c.b16 %v160, %v158
    %v187 = vpack.c.b16 %v163, %v161
    %v188 = vpack.c.b16 %v164, %v162
    %v189 = vpack.c.b16 %v167, %v165
    %v190 = vpack.c.b16 %v168, %v166
    %v191 = vpack.c.b16 %v171, %v169
    %v192 = vpack.c.b16 %v172, %v170
    %v193 = vpack.c.b16 %v175, %v173
    %v194 = vpack.c.b16 %v176, %v174
    %v195 = vpack.c.b16 %v179, %v177
    %v196 = vpack.c.b16 %v180, %v178
    %213 = vmatprep.subr.bf16.mxu0 %v182
    %214 = vmatpush1.bf16.msra.mxu0 %v181
    %215 = vmatprep.subr.bf16.mxu0 %v184
    %216 = vmatpush1.bf16.msra.mxu0 %v183
    %217 = vmatprep.subr.bf16.mxu0 %v186
    %218 = vmatpush1.bf16.msra.mxu0 %v185
    %219 = vmatprep.subr.bf16.mxu0 %v188
    %220 = vmatpush1.bf16.msra.mxu0 %v187
    %221 = vmatprep.subr.bf16.mxu0 %v190
    %222 = vmatpush1.bf16.msra.mxu0 %v189
    %223 = vmatprep.subr.bf16.mxu0 %v192
    %224 = vmatpush1.bf16.msra.mxu0 %v191
    %225 = vmatprep.subr.bf16.mxu0 %v194
    %226 = vmatpush1.bf16.msra.mxu0 %v193
    %227 = vmatprep.subr.bf16.mxu0 %v196
    %228 = vmatpush1.bf16.msra.mxu0 %v195
    %229 = vmatprep.subr.bf16.mxu0 0
    %230 = vmatpush1.bf16.msra.mxu0 0
    %231 = vmatprep.subr.bf16.mxu0 0
    %232 = vmatpush1.bf16.msra.mxu0 0
    %233 = vmatprep.subr.bf16.mxu0 0
    %234 = vmatpush1.bf16.msra.mxu0 0
    %235 = vmatprep.subr.bf16.mxu0 0
    %236 = vmatpush1.bf16.msra.mxu0 0
    %237 = vmatprep.subr.bf16.mxu0 0
    %238 = vmatpush1.bf16.msra.mxu0 0
    %239 = vmatprep.subr.bf16.mxu0 0
    %240 = vmatpush1.bf16.msra.mxu0 0
    %241 = vmatprep.subr.bf16.mxu0 0
    %242 = vmatpush1.bf16.msra.mxu0 0
    %243 = vmatprep.subr.bf16.mxu0 0
    %244 = vmatpush1.bf16.msra.mxu0 0
    %245 = vmatprep.mubr.bf16.mxu0 0
    %246 = vmatmul.mubr.bf16.gmra.mrb[0].mxu0 %v104
    %v247 = vpop.f32.mrb[0].mxu0
    %v248 = vadd.f32 %v126, %v247
    %v249 = vpop.f32.mrb[0].mxu0
    %v250 = vadd.f32 %v130, %v249
    %v251 = vpop.f32.mrb[0].mxu0
    %v252 = vpop.f32.mrb[0].mxu0
    %253 = vdwg.mxu0
    %v254 = vmax.f32 %v248, 0.0
    %v255 = vmax.f32 %v250, 0.0
    %v256 = vpack.c.bf16 %v254, %v254
    %v257 = vpack.c.bf16 %v255, %v255
    %v258 = vld [vmem:[%s5] sm:$0xff]
    %v259 = vld [vmem:[%s5 + $0x8] sm:$0xff]
    %v260 = vld [vmem:[%s5 + $0x10] sm:$0xff]
    %v261 = vld [vmem:[%s5 + $0x18] sm:$0xff]
    %v262 = vld [vmem:[%s5 + $0x20] sm:$0xff]
    %v263 = vld [vmem:[%s5 + $0x28] sm:$0xff]
    %v264 = vld [vmem:[%s5 + $0x30] sm:$0xff]
    %v265 = vld [vmem:[%s5 + $0x38] sm:$0xff]
    %v266 = vld [vmem:[%s5 + $0x40] sm:$0xff]
    %v267 = vld [vmem:[%s5 + $0x48] sm:$0xff]
    %v268 = vld [vmem:[%s5 + $0x50] sm:$0xff]
    %v269 = vld [vmem:[%s5 + $0x58] sm:$0xff]
    %v270 = vld [vmem:[%s5 + $0x60] sm:$0xff]
    %v271 = vld [vmem:[%s5 + $0x68] sm:$0xff]
    %v272 = vld [vmem:[%s5 + $0x70] sm:$0xff]
    %v273 = vld [vmem:[%s5 + $0x78] sm:$0xff]
    %v274 = vld [vmem:[%s5 + $0x80] sm:$0xff]
    %v275 = vld [vmem:[%s5 + $0x88] sm:$0xff]
    %v276 = vld [vmem:[%s5 + $0x90] sm:$0xff]
    %v277 = vld [vmem:[%s5 + $0x98] sm:$0xff]
    %v278 = vld [vmem:[%s5 + $0xa0] sm:$0xff]
    %v279 = vld [vmem:[%s5 + $0xa8] sm:$0xff]
    %v280 = vld [vmem:[%s5 + $0xb0] sm:$0xff]
    %v281 = vld [vmem:[%s5 + $0xb8] sm:$0xff]
    %v282 = vld [vmem:[%s5 + $0xc0] sm:$0xff]
    %v283 = vld [vmem:[%s5 + $0xc8] sm:$0xff]
    %v284 = vld [vmem:[%s5 + $0xd0] sm:$0xff]
    %v285 = vld [vmem:[%s5 + $0xd8] sm:$0xff]
    %v286 = vld [vmem:[%s5 + $0xe0] sm:$0xff]
    %v287 = vld [vmem:[%s5 + $0xe8] sm:$0xff]
    %v288 = vld [vmem:[%s5 + $0xf0] sm:$0xff]
    %v289 = vld [vmem:[%s5 + $0xf8] sm:$0xff]
    %v290 = vld [vmem:[%s5 + $0x100] sm:$0xff]
    %v291 = vld [vmem:[%s5 + $0x108] sm:$0xff]
    %v292 = vld [vmem:[%s5 + $0x110] sm:$0xff]
    %v293 = vld [vmem:[%s5 + $0x118] sm:$0xff]
    %v294 = vld [vmem:[%s5 + $0x120] sm:$0xff]
    %v295 = vld [vmem:[%s5 + $0x128] sm:$0xff]
    %v296 = vld [vmem:[%s5 + $0x130] sm:$0xff]
    %v297 = vld [vmem:[%s5 + $0x138] sm:$0xff]
    %v298 = vld [vmem:[%s5 + $0x140] sm:$0xff]
    %v299 = vld [vmem:[%s5 + $0x148] sm:$0xff]
    %v300 = vld [vmem:[%s5 + $0x150] sm:$0xff]
    %v301 = vld [vmem:[%s5 + $0x158] sm:$0xff]
    %v302 = vld [vmem:[%s5 + $0x160] sm:$0xff]
    %v303 = vld [vmem:[%s5 + $0x168] sm:$0xff]
    %v304 = vld [vmem:[%s5 + $0x170] sm:$0xff]
    %v305 = vld [vmem:[%s5 + $0x178] sm:$0xff]
    %v306 = vld [vmem:[%s5 + $0x180] sm:$0xff]
    %v307 = vld [vmem:[%s5 + $0x188] sm:$0xff]
    %v308 = vld [vmem:[%s5 + $0x190] sm:$0xff]
    %v309 = vld [vmem:[%s5 + $0x198] sm:$0xff]
    %v310 = vld [vmem:[%s5 + $0x1a0] sm:$0xff]
    %v311 = vld [vmem:[%s5 + $0x1a8] sm:$0xff]
    %v312 = vld [vmem:[%s5 + $0x1b0] sm:$0xff]
    %v313 = vld [vmem:[%s5 + $0x1b8] sm:$0xff]
    %v314 = vld [vmem:[%s5 + $0x1c0] sm:$0xff]
    %v315 = vld [vmem:[%s5 + $0x1c8] sm:$0xff]
    %v316 = vld [vmem:[%s5 + $0x1d0] sm:$0xff]
    %v317 = vld [vmem:[%s5 + $0x1d8] sm:$0xff]
    %v318 = vld [vmem:[%s5 + $0x1e0] sm:$0xff]
    %v319 = vld [vmem:[%s5 + $0x1e8] sm:$0xff]
    %v320 = vld [vmem:[%s5 + $0x1f0] sm:$0xff]
    %v321 = vld [vmem:[%s5 + $0x1f8] sm:$0xff]
    %v322 = vld [vmem:[%s6] sm:$0xf]
    %v324 = vlaneseq
    %v325 = vshrl.u32 %v324, 7
    %v326 = vsub.s32 0, %v325
    %v327 = vrot.slane %v322, %v326
    %v328 = vlaneseq
    %v329 = vshrl.u32 %v328, 7
    %v330 = vsub.s32 1, %v329
    %v331 = vrot.slane %v322, %v330
    %v332 = vlaneseq
    %v333 = vshrl.u32 %v332, 7
    %v334 = vsub.s32 2, %v333
    %v335 = vrot.slane %v322, %v334
    %v336 = vlaneseq
    %v337 = vshrl.u32 %v336, 7
    %v338 = vsub.s32 3, %v337
    %v339 = vrot.slane %v322, %v338
    %v408 = vunpack.c.l.b16 %v258
    %v409 = vunpack.c.h.b16 %v258
    %v410 = vunpack.c.l.b16 %v259
    %v411 = vunpack.c.h.b16 %v259
    %v412 = vunpack.c.l.b16 %v260
    %v413 = vunpack.c.h.b16 %v260
    %v414 = vunpack.c.l.b16 %v261
    %v415 = vunpack.c.h.b16 %v261
    %v416 = vunpack.c.l.b16 %v262
    %v417 = vunpack.c.h.b16 %v262
    %v418 = vunpack.c.l.b16 %v263
    %v419 = vunpack.c.h.b16 %v263
    %v420 = vunpack.c.l.b16 %v264
    %v421 = vunpack.c.h.b16 %v264
    %v422 = vunpack.c.l.b16 %v265
    %v423 = vunpack.c.h.b16 %v265
    %v424 = vunpack.c.l.b16 %v266
    %v425 = vunpack.c.h.b16 %v266
    %v426 = vunpack.c.l.b16 %v267
    %v427 = vunpack.c.h.b16 %v267
    %v428 = vunpack.c.l.b16 %v268
    %v429 = vunpack.c.h.b16 %v268
    %v430 = vunpack.c.l.b16 %v269
    %v431 = vunpack.c.h.b16 %v269
    %v432 = vunpack.c.l.b16 %v270
    %v433 = vunpack.c.h.b16 %v270
    %v434 = vunpack.c.l.b16 %v271
    %v435 = vunpack.c.h.b16 %v271
    %v436 = vunpack.c.l.b16 %v272
    %v437 = vunpack.c.h.b16 %v272
    %v438 = vunpack.c.l.b16 %v273
    %v439 = vunpack.c.h.b16 %v273
    %v440 = vunpack.c.l.b16 %v274
    %v441 = vunpack.c.h.b16 %v274
    %v442 = vunpack.c.l.b16 %v275
    %v443 = vunpack.c.h.b16 %v275
    %v444 = vunpack.c.l.b16 %v276
    %v445 = vunpack.c.h.b16 %v276
    %v446 = vunpack.c.l.b16 %v277
    %v447 = vunpack.c.h.b16 %v277
    %v448 = vunpack.c.l.b16 %v278
    %v449 = vunpack.c.h.b16 %v278
    %v450 = vunpack.c.l.b16 %v279
    %v451 = vunpack.c.h.b16 %v279
    %v452 = vunpack.c.l.b16 %v280
    %v453 = vunpack.c.h.b16 %v280
    %v454 = vunpack.c.l.b16 %v281
    %v455 = vunpack.c.h.b16 %v281
    %v456 = vunpack.c.l.b16 %v282
    %v457 = vunpack.c.h.b16 %v282
    %v458 = vunpack.c.l.b16 %v283
    %v459 = vunpack.c.h.b16 %v283
    %v460 = vunpack.c.l.b16 %v284
    %v461 = vunpack.c.h.b16 %v284
    %v462 = vunpack.c.l.b16 %v285
    %v463 = vunpack.c.h.b16 %v285
    %v464 = vunpack.c.l.b16 %v286
    %v465 = vunpack.c.h.b16 %v286
    %v466 = vunpack.c.l.b16 %v287
    %v467 = vunpack.c.h.b16 %v287
    %v468 = vunpack.c.l.b16 %v288
    %v469 = vunpack.c.h.b16 %v288
    %v470 = vunpack.c.l.b16 %v289
    %v471 = vunpack.c.h.b16 %v289
    %v472 = vunpack.c.l.b16 %v290
    %v473 = vunpack.c.h.b16 %v290
    %v474 = vunpack.c.l.b16 %v291
    %v475 = vunpack.c.h.b16 %v291
    %v476 = vunpack.c.l.b16 %v292
    %v477 = vunpack.c.h.b16 %v292
    %v478 = vunpack.c.l.b16 %v293
    %v479 = vunpack.c.h.b16 %v293
    %v480 = vunpack.c.l.b16 %v294
    %v481 = vunpack.c.h.b16 %v294
    %v482 = vunpack.c.l.b16 %v295
    %v483 = vunpack.c.h.b16 %v295
    %v484 = vunpack.c.l.b16 %v296
    %v485 = vunpack.c.h.b16 %v296
    %v486 = vunpack.c.l.b16 %v297
    %v487 = vunpack.c.h.b16 %v297
    %v488 = vunpack.c.l.b16 %v298
    %v489 = vunpack.c.h.b16 %v298
    %v490 = vunpack.c.l.b16 %v299
    %v491 = vunpack.c.h.b16 %v299
    %v492 = vunpack.c.l.b16 %v300
    %v493 = vunpack.c.h.b16 %v300
    %v494 = vunpack.c.l.b16 %v301
    %v495 = vunpack.c.h.b16 %v301
    %v496 = vunpack.c.l.b16 %v302
    %v497 = vunpack.c.h.b16 %v302
    %v498 = vunpack.c.l.b16 %v303
    %v499 = vunpack.c.h.b16 %v303
    %v500 = vunpack.c.l.b16 %v304
    %v501 = vunpack.c.h.b16 %v304
    %v502 = vunpack.c.l.b16 %v305
    %v503 = vunpack.c.h.b16 %v305
    %v504 = vunpack.c.l.b16 %v306
    %v505 = vunpack.c.h.b16 %v306
    %v506 = vunpack.c.l.b16 %v307
    %v507 = vunpack.c.h.b16 %v307
    %v508 = vunpack.c.l.b16 %v308
    %v509 = vunpack.c.h.b16 %v308
    %v510 = vunpack.c.l.b16 %v309
    %v511 = vunpack.c.h.b16 %v309
    %v512 = vunpack.c.l.b16 %v310
    %v513 = vunpack.c.h.b16 %v310
    %v514 = vunpack.c.l.b16 %v311
    %v515 = vunpack.c.h.b16 %v311
    %v516 = vunpack.c.l.b16 %v312
    %v517 = vunpack.c.h.b16 %v312
    %v518 = vunpack.c.l.b16 %v313
    %v519 = vunpack.c.h.b16 %v313
    %v520 = vunpack.c.l.b16 %v314
    %v521 = vunpack.c.h.b16 %v314
    %v522 = vunpack.c.l.b16 %v315
    %v523 = vunpack.c.h.b16 %v315
    %v524 = vunpack.c.l.b16 %v316
    %v525 = vunpack.c.h.b16 %v316
    %v526 = vunpack.c.l.b16 %v317
    %v527 = vunpack.c.h.b16 %v317
    %v528 = vunpack.c.l.b16 %v318
    %v529 = vunpack.c.h.b16 %v318
    %v530 = vunpack.c.l.b16 %v319
    %v531 = vunpack.c.h.b16 %v319
    %v532 = vunpack.c.l.b16 %v320
    %v533 = vunpack.c.h.b16 %v320
    %v534 = vunpack.c.l.b16 %v321
    %v535 = vunpack.c.h.b16 %v321
    %v536 = vpack.c.b16 %v412, %v408
    %v537 = vpack.c.b16 %v413, %v409
    %v538 = vpack.c.b16 %v414, %v410
    %v539 = vpack.c.b16 %v415, %v411
    %v540 = vpack.c.b16 %v420, %v416
    %v541 = vpack.c.b16 %v421, %v417
    %v542 = vpack.c.b16 %v422, %v418
    %v543 = vpack.c.b16 %v423, %v419
    %v544 = vpack.c.b16 %v428, %v424
    %v545 = vpack.c.b16 %v429, %v425
    %v546 = vpack.c.b16 %v430, %v426
    %v547 = vpack.c.b16 %v431, %v427
    %v548 = vpack.c.b16 %v436, %v432
    %v549 = vpack.c.b16 %v437, %v433
    %v550 = vpack.c.b16 %v438, %v434
    %v551 = vpack.c.b16 %v439, %v435
    %v552 = vpack.c.b16 %v444, %v440
    %v553 = vpack.c.b16 %v445, %v441
    %v554 = vpack.c.b16 %v446, %v442
    %v555 = vpack.c.b16 %v447, %v443
    %v556 = vpack.c.b16 %v452, %v448
    %v557 = vpack.c.b16 %v453, %v449
    %v558 = vpack.c.b16 %v454, %v450
    %v559 = vpack.c.b16 %v455, %v451
    %v560 = vpack.c.b16 %v460, %v456
    %v561 = vpack.c.b16 %v461, %v457
    %v562 = vpack.c.b16 %v462, %v458
    %v563 = vpack.c.b16 %v463, %v459
    %v564 = vpack.c.b16 %v468, %v464
    %v565 = vpack.c.b16 %v469, %v465
    %v566 = vpack.c.b16 %v470, %v466
    %v567 = vpack.c.b16 %v471, %v467
    %v568 = vpack.c.b16 %v476, %v472
    %v569 = vpack.c.b16 %v477, %v473
    %v570 = vpack.c.b16 %v478, %v474
    %v571 = vpack.c.b16 %v479, %v475
    %v572 = vpack.c.b16 %v484, %v480
    %v573 = vpack.c.b16 %v485, %v481
    %v574 = vpack.c.b16 %v486, %v482
    %v575 = vpack.c.b16 %v487, %v483
    %v576 = vpack.c.b16 %v492, %v488
    %v577 = vpack.c.b16 %v493, %v489
    %v578 = vpack.c.b16 %v494, %v490
    %v579 = vpack.c.b16 %v495, %v491
    %v580 = vpack.c.b16 %v500, %v496
    %v581 = vpack.c.b16 %v501, %v497
    %v582 = vpack.c.b16 %v502, %v498
    %v583 = vpack.c.b16 %v503, %v499
    %v584 = vpack.c.b16 %v508, %v504
    %v585 = vpack.c.b16 %v509, %v505
    %v586 = vpack.c.b16 %v510, %v506
    %v587 = vpack.c.b16 %v511, %v507
    %v588 = vpack.c.b16 %v516, %v512
    %v589 = vpack.c.b16 %v517, %v513
    %v590 = vpack.c.b16 %v518, %v514
    %v591 = vpack.c.b16 %v519, %v515
    %v592 = vpack.c.b16 %v524, %v520
    %v593 = vpack.c.b16 %v525, %v521
    %v594 = vpack.c.b16 %v526, %v522
    %v595 = vpack.c.b16 %v527, %v523
    %v596 = vpack.c.b16 %v532, %v528
    %v597 = vpack.c.b16 %v533, %v529
    %v598 = vpack.c.b16 %v534, %v530
    %v599 = vpack.c.b16 %v535, %v531
    %664 = vmatprep.subr.bf16.mxu0 %v537
    %665 = vmatpush1.bf16.msra.mxu0 %v536
    %666 = vmatprep.subr.bf16.mxu0 %v541
    %667 = vmatpush1.bf16.msra.mxu0 %v540
    %668 = vmatprep.subr.bf16.mxu0 %v545
    %669 = vmatpush1.bf16.msra.mxu0 %v544
    %670 = vmatprep.subr.bf16.mxu0 %v549
    %671 = vmatpush1.bf16.msra.mxu0 %v548
    %672 = vmatprep.subr.bf16.mxu0 %v553
    %673 = vmatpush1.bf16.msra.mxu0 %v552
    %674 = vmatprep.subr.bf16.mxu0 %v557
    %675 = vmatpush1.bf16.msra.mxu0 %v556
    %676 = vmatprep.subr.bf16.mxu0 %v561
    %677 = vmatpush1.bf16.msra.mxu0 %v560
    %678 = vmatprep.subr.bf16.mxu0 %v565
    %679 = vmatpush1.bf16.msra.mxu0 %v564
    %680 = vmatprep.subr.bf16.mxu0 %v569
    %681 = vmatpush1.bf16.msra.mxu0 %v568
    %682 = vmatprep.subr.bf16.mxu0 %v573
    %683 = vmatpush1.bf16.msra.mxu0 %v572
    %684 = vmatprep.subr.bf16.mxu0 %v577
    %685 = vmatpush1.bf16.msra.mxu0 %v576
    %686 = vmatprep.subr.bf16.mxu0 %v581
    %687 = vmatpush1.bf16.msra.mxu0 %v580
    %688 = vmatprep.subr.bf16.mxu0 %v585
    %689 = vmatpush1.bf16.msra.mxu0 %v584
    %690 = vmatprep.subr.bf16.mxu0 %v589
    %691 = vmatpush1.bf16.msra.mxu0 %v588
    %692 = vmatprep.subr.bf16.mxu0 %v593
    %693 = vmatpush1.bf16.msra.mxu0 %v592
    %694 = vmatprep.subr.bf16.mxu0 %v597
    %695 = vmatpush1.bf16.msra.mxu0 %v596
    %696 = vmatprep.mubr.bf16.mxu0 %v257
    %697 = vmatmul.mubr.bf16.gmra.mrb[0].mxu0 %v256
    %v698 = vpop.f32.mrb[0].mxu0
    %v699 = vadd.f32 %v327, %v698
    %v700 = vpop.f32.mrb[0].mxu0
    %v701 = vadd.f32 %v331, %v700
    %v702 = vpop.f32.mrb[0].mxu0
    %v703 = vpop.f32.mrb[0].mxu0
    %704 = vdwg.mxu0
    %705 = vmatprep.subr.bf16.mxu0 %v539
    %706 = vmatpush1.bf16.msra.mxu0 %v538
    %707 = vmatprep.subr.bf16.mxu0 %v543
    %708 = vmatpush1.bf16.msra.mxu0 %v542
    %709 = vmatprep.subr.bf16.mxu0 %v547
    %710 = vmatpush1.bf16.msra.mxu0 %v546
    %711 = vmatprep.subr.bf16.mxu0 %v551
    %712 = vmatpush1.bf16.msra.mxu0 %v550
    %713 = vmatprep.subr.bf16.mxu0 %v555
    %714 = vmatpush1.bf16.msra.mxu0 %v554
    %715 = vmatprep.subr.bf16.mxu0 %v559
    %716 = vmatpush1.bf16.msra.mxu0 %v558
    %717 = vmatprep.subr.bf16.mxu0 %v563
    %718 = vmatpush1.bf16.msra.mxu0 %v562
    %719 = vmatprep.subr.bf16.mxu0 %v567
    %720 = vmatpush1.bf16.msra.mxu0 %v566
    %721 = vmatprep.subr.bf16.mxu0 %v571
    %722 = vmatpush1.bf16.msra.mxu0 %v570
    %723 = vmatprep.subr.bf16.mxu0 %v575
    %724 = vmatpush1.bf16.msra.mxu0 %v574
    %725 = vmatprep.subr.bf16.mxu0 %v579
    %726 = vmatpush1.bf16.msra.mxu0 %v578
    %727 = vmatprep.subr.bf16.mxu0 %v583
    %728 = vmatpush1.bf16.msra.mxu0 %v582
    %729 = vmatprep.subr.bf16.mxu0 %v587
    %730 = vmatpush1.bf16.msra.mxu0 %v586
    %731 = vmatprep.subr.bf16.mxu0 %v591
    %732 = vmatpush1.bf16.msra.mxu0 %v590
    %733 = vmatprep.subr.bf16.mxu0 %v595
    %734 = vmatpush1.bf16.msra.mxu0 %v594
    %735 = vmatprep.subr.bf16.mxu0 %v599
    %736 = vmatpush1.bf16.msra.mxu0 %v598
    %737 = vmatprep.mubr.bf16.mxu0 %v257
    %738 = vmatmul.mubr.bf16.gmra.mrb[0].mxu0 %v256
    %v739 = vpop.f32.mrb[0].mxu0
    %v740 = vadd.f32 %v335, %v739
    %v741 = vpop.f32.mrb[0].mxu0
    %v742 = vadd.f32 %v339, %v741
    %v743 = vpop.f32.mrb[0].mxu0
    %v744 = vpop.f32.mrb[0].mxu0
    %745 = vdwg.mxu0
    %v746 = vmax.f32 %v699, 0.0
    %v747 = vmax.f32 %v701, 0.0
    %v748 = vmax.f32 %v740, 0.0
    %v749 = vmax.f32 %v742, 0.0
    %v750 = vpack.c.bf16 %v746, %v746
    %v751 = vpack.c.bf16 %v747, %v747
    %v752 = vpack.c.bf16 %v748, %v748
    %v753 = vpack.c.bf16 %v749, %v749
    %v754 = vld [vmem:[%s7] sm:$0xf]
    %v755 = vld [vmem:[%s7 + $0x4] sm:$0xf]
    %v756 = vld [vmem:[%s7 + $0x8] sm:$0xf]
    %v757 = vld [vmem:[%s7 + $0xc] sm:$0xf]
    %v758 = vld [vmem:[%s7 + $0x10] sm:$0xf]
    %v759 = vld [vmem:[%s7 + $0x14] sm:$0xf]
    %v760 = vld [vmem:[%s7 + $0x18] sm:$0xf]
    %v761 = vld [vmem:[%s7 + $0x1c] sm:$0xf]
    %v762 = vld [vmem:[%s7 + $0x20] sm:$0xf]
    %v763 = vld [vmem:[%s7 + $0x24] sm:$0xf]
    %v764 = vld [vmem:[%s7 + $0x28] sm:$0xf]
    %v765 = vld [vmem:[%s7 + $0x2c] sm:$0xf]
    %v766 = vld [vmem:[%s7 + $0x30] sm:$0xf]
    %v767 = vld [vmem:[%s7 + $0x34] sm:$0xf]
    %v768 = vld [vmem:[%s7 + $0x38] sm:$0xf]
    %v769 = vld [vmem:[%s7 + $0x3c] sm:$0xf]
    %v770 = vld [vmem:[%s7 + $0x40] sm:$0xf]
    %v771 = vld [vmem:[%s7 + $0x44] sm:$0xf]
    %v772 = vld [vmem:[%s7 + $0x48] sm:$0xf]
    %v773 = vld [vmem:[%s7 + $0x4c] sm:$0xf]
    %v774 = vld [vmem:[%s7 + $0x50] sm:$0xf]
    %v775 = vld [vmem:[%s7 + $0x54] sm:$0xf]
    %v776 = vld [vmem:[%s7 + $0x58] sm:$0xf]
    %v777 = vld [vmem:[%s7 + $0x5c] sm:$0xf]
    %v778 = vld [vmem:[%s7 + $0x60] sm:$0xf]
    %v779 = vld [vmem:[%s7 + $0x64] sm:$0xf]
    %v780 = vld [vmem:[%s7 + $0x68] sm:$0xf]
    %v781 = vld [vmem:[%s7 + $0x6c] sm:$0xf]
    %v782 = vld [vmem:[%s7 + $0x70] sm:$0xf]
    %v783 = vld [vmem:[%s7 + $0x74] sm:$0xf]
    %v784 = vld [vmem:[%s7 + $0x78] sm:$0xf]
    %v785 = vld [vmem:[%s7 + $0x7c] sm:$0xf]
    %v786 = vld [vmem:[%s7 + $0x80] sm:$0xf]
    %v787 = vld [vmem:[%s7 + $0x84] sm:$0xf]
    %v788 = vld [vmem:[%s7 + $0x88] sm:$0xf]
    %v789 = vld [vmem:[%s7 + $0x8c] sm:$0xf]
    %v790 = vld [vmem:[%s7 + $0x90] sm:$0xf]
    %v791 = vld [vmem:[%s7 + $0x94] sm:$0xf]
    %v792 = vld [vmem:[%s7 + $0x98] sm:$0xf]
    %v793 = vld [vmem:[%s7 + $0x9c] sm:$0xf]
    %v794 = vld [vmem:[%s7 + $0xa0] sm:$0xf]
    %v795 = vld [vmem:[%s7 + $0xa4] sm:$0xf]
    %v796 = vld [vmem:[%s7 + $0xa8] sm:$0xf]
    %v797 = vld [vmem:[%s7 + $0xac] sm:$0xf]
    %v798 = vld [vmem:[%s7 + $0xb0] sm:$0xf]
    %v799 = vld [vmem:[%s7 + $0xb4] sm:$0xf]
    %v800 = vld [vmem:[%s7 + $0xb8] sm:$0xf]
    %v801 = vld [vmem:[%s7 + $0xbc] sm:$0xf]
    %v802 = vld [vmem:[%s7 + $0xc0] sm:$0xf]
    %v803 = vld [vmem:[%s7 + $0xc4] sm:$0xf]
    %v804 = vld [vmem:[%s7 + $0xc8] sm:$0xf]
    %v805 = vld [vmem:[%s7 + $0xcc] sm:$0xf]
    %v806 = vld [vmem:[%s7 + $0xd0] sm:$0xf]
    %v807 = vld [vmem:[%s7 + $0xd4] sm:$0xf]
    %v808 = vld [vmem:[%s7 + $0xd8] sm:$0xf]
    %v809 = vld [vmem:[%s7 + $0xdc] sm:$0xf]
    %v810 = vld [vmem:[%s7 + $0xe0] sm:$0xf]
    %v811 = vld [vmem:[%s7 + $0xe4] sm:$0xf]
    %v812 = vld [vmem:[%s7 + $0xe8] sm:$0xf]
    %v813 = vld [vmem:[%s7 + $0xec] sm:$0xf]
    %v814 = vld [vmem:[%s7 + $0xf0] sm:$0xf]
    %v815 = vld [vmem:[%s7 + $0xf4] sm:$0xf]
    %v816 = vld [vmem:[%s7 + $0xf8] sm:$0xf]
    %v817 = vld [vmem:[%s7 + $0xfc] sm:$0xf]
    %v818 = vld [vmem:[%s8] sm:$0x1]
    %v820 = vlaneseq
    %v821 = vshrl.u32 %v820, 7
    %v822 = vsub.s32 0, %v821
    %v823 = vrot.slane %v818, %v822
    %v889 = vunpack.c.l.b16 %v754
    %v890 = vunpack.c.l.b16 %v755
    %v891 = vunpack.c.l.b16 %v756
    %v892 = vunpack.c.l.b16 %v757
    %v893 = vunpack.c.l.b16 %v758
    %v894 = vunpack.c.l.b16 %v759
    %v895 = vunpack.c.l.b16 %v760
    %v896 = vunpack.c.l.b16 %v761
    %v897 = vunpack.c.l.b16 %v762
    %v898 = vunpack.c.l.b16 %v763
    %v899 = vunpack.c.l.b16 %v764
    %v900 = vunpack.c.l.b16 %v765
    %v901 = vunpack.c.l.b16 %v766
    %v902 = vunpack.c.l.b16 %v767
    %v903 = vunpack.c.l.b16 %v768
    %v904 = vunpack.c.l.b16 %v769
    %v905 = vunpack.c.l.b16 %v770
    %v906 = vunpack.c.l.b16 %v771
    %v907 = vunpack.c.l.b16 %v772
    %v908 = vunpack.c.l.b16 %v773
    %v909 = vunpack.c.l.b16 %v774
    %v910 = vunpack.c.l.b16 %v775
    %v911 = vunpack.c.l.b16 %v776
    %v912 = vunpack.c.l.b16 %v777
    %v913 = vunpack.c.l.b16 %v778
    %v914 = vunpack.c.l.b16 %v779
    %v915 = vunpack.c.l.b16 %v780
    %v916 = vunpack.c.l.b16 %v781
    %v917 = vunpack.c.l.b16 %v782
    %v918 = vunpack.c.l.b16 %v783
    %v919 = vunpack.c.l.b16 %v784
    %v920 = vunpack.c.l.b16 %v785
    %v921 = vunpack.c.l.b16 %v786
    %v922 = vunpack.c.l.b16 %v787
    %v923 = vunpack.c.l.b16 %v788
    %v924 = vunpack.c.l.b16 %v789
    %v925 = vunpack.c.l.b16 %v790
    %v926 = vunpack.c.l.b16 %v791
    %v927 = vunpack.c.l.b16 %v792
    %v928 = vunpack.c.l.b16 %v793
    %v929 = vunpack.c.l.b16 %v794
    %v930 = vunpack.c.l.b16 %v795
    %v931 = vunpack.c.l.b16 %v796
    %v932 = vunpack.c.l.b16 %v797
    %v933 = vunpack.c.l.b16 %v798
    %v934 = vunpack.c.l.b16 %v799
    %v935 = vunpack.c.l.b16 %v800
    %v936 = vunpack.c.l.b16 %v801
    %v937 = vunpack.c.l.b16 %v802
    %v938 = vunpack.c.l.b16 %v803
    %v939 = vunpack.c.l.b16 %v804
    %v940 = vunpack.c.l.b16 %v805
    %v941 = vunpack.c.l.b16 %v806
    %v942 = vunpack.c.l.b16 %v807
    %v943 = vunpack.c.l.b16 %v808
    %v944 = vunpack.c.l.b16 %v809
    %v945 = vunpack.c.l.b16 %v810
    %v946 = vunpack.c.l.b16 %v811
    %v947 = vunpack.c.l.b16 %v812
    %v948 = vunpack.c.l.b16 %v813
    %v949 = vunpack.c.l.b16 %v814
    %v950 = vunpack.c.l.b16 %v815
    %v951 = vunpack.c.l.b16 %v816
    %v952 = vunpack.c.l.b16 %v817
    %v953 = vpack.c.b16 %v890, %v889
    %v954 = vpack.c.b16 %v892, %v891
    %v955 = vpack.c.b16 %v894, %v893
    %v956 = vpack.c.b16 %v896, %v895
    %v957 = vpack.c.b16 %v898, %v897
    %v958 = vpack.c.b16 %v900, %v899
    %v959 = vpack.c.b16 %v902, %v901
    %v960 = vpack.c.b16 %v904, %v903
    %v961 = vpack.c.b16 %v906, %v905
    %v962 = vpack.c.b16 %v908, %v907
    %v963 = vpack.c.b16 %v910, %v909
    %v964 = vpack.c.b16 %v912, %v911
    %v965 = vpack.c.b16 %v914, %v913
    %v966 = vpack.c.b16 %v916, %v915
    %v967 = vpack.c.b16 %v918, %v917
    %v968 = vpack.c.b16 %v920, %v919
    %v969 = vpack.c.b16 %v922, %v921
    %v970 = vpack.c.b16 %v924, %v923
    %v971 = vpack.c.b16 %v926, %v925
    %v972 = vpack.c.b16 %v928, %v927
    %v973 = vpack.c.b16 %v930, %v929
    %v974 = vpack.c.b16 %v932, %v931
    %v975 = vpack.c.b16 %v934, %v933
    %v976 = vpack.c.b16 %v936, %v935
    %v977 = vpack.c.b16 %v938, %v937
    %v978 = vpack.c.b16 %v940, %v939
    %v979 = vpack.c.b16 %v942, %v941
    %v980 = vpack.c.b16 %v944, %v943
    %v981 = vpack.c.b16 %v946, %v945
    %v982 = vpack.c.b16 %v948, %v947
    %v983 = vpack.c.b16 %v950, %v949
    %v984 = vpack.c.b16 %v952, %v951
    %1017 = vmatprep.subr.bf16.mxu0 0
    %1018 = vmatpush1.bf16.msra.mxu0 %v953
    %1019 = vmatprep.subr.bf16.mxu0 0
    %1020 = vmatpush1.bf16.msra.mxu0 %v954
    %1021 = vmatprep.subr.bf16.mxu0 0
    %1022 = vmatpush1.bf16.msra.mxu0 %v955
    %1023 = vmatprep.subr.bf16.mxu0 0
    %1024 = vmatpush1.bf16.msra.mxu0 %v956
    %1025 = vmatprep.subr.bf16.mxu0 0
    %1026 = vmatpush1.bf16.msra.mxu0 %v957
    %1027 = vmatprep.subr.bf16.mxu0 0
    %1028 = vmatpush1.bf16.msra.mxu0 %v958
    %1029 = vmatprep.subr.bf16.mxu0 0
    %1030 = vmatpush1.bf16.msra.mxu0 %v959
    %1031 = vmatprep.subr.bf16.mxu0 0
    %1032 = vmatpush1.bf16.msra.mxu0 %v960
    %1033 = vmatprep.subr.bf16.mxu0 0
    %1034 = vmatpush1.bf16.msra.mxu0 %v961
    %1035 = vmatprep.subr.bf16.mxu0 0
    %1036 = vmatpush1.bf16.msra.mxu0 %v962
    %1037 = vmatprep.subr.bf16.mxu0 0
    %1038 = vmatpush1.bf16.msra.mxu0 %v963
    %1039 = vmatprep.subr.bf16.mxu0 0
    %1040 = vmatpush1.bf16.msra.mxu0 %v964
    %1041 = vmatprep.subr.bf16.mxu0 0
    %1042 = vmatpush1.bf16.msra.mxu0 %v965
    %1043 = vmatprep.subr.bf16.mxu0 0
    %1044 = vmatpush1.bf16.msra.mxu0 %v966
    %1045 = vmatprep.subr.bf16.mxu0 0
    %1046 = vmatpush1.bf16.msra.mxu0 %v967
    %1047 = vmatprep.subr.bf16.mxu0 0
    %1048 = vmatpush1.bf16.msra.mxu0 %v968
    %1049 = vmatprep.mubr.bf16.mxu0 %v751
    %1050 = vmatmul.mubr.bf16.gmra.mrb[0].mxu0 %v750
    %v1051 = vpop.f32.mrb[0].mxu0
    %v1052 = vadd.f32 %v823, %v1051
    %v1053 = vpop.f32.mrb[0].mxu0
    %v1054 = vpop.f32.mrb[0].mxu0
    %v1055 = vpop.f32.mrb[0].mxu0
    %1056 = vdwg.mxu0
    %1057 = vmatprep.subr.bf16.mxu0 0
    %1058 = vmatpush1.bf16.msra.mxu0 %v969
    %1059 = vmatprep.subr.bf16.mxu0 0
    %1060 = vmatpush1.bf16.msra.mxu0 %v970
    %1061 = vmatprep.subr.bf16.mxu0 0
    %1062 = vmatpush1.bf16.msra.mxu0 %v971
    %1063 = vmatprep.subr.bf16.mxu0 0
    %1064 = vmatpush1.bf16.msra.mxu0 %v972
    %1065 = vmatprep.subr.bf16.mxu0 0
    %1066 = vmatpush1.bf16.msra.mxu0 %v973
    %1067 = vmatprep.subr.bf16.mxu0 0
    %1068 = vmatpush1.bf16.msra.mxu0 %v974
    %1069 = vmatprep.subr.bf16.mxu0 0
    %1070 = vmatpush1.bf16.msra.mxu0 %v975
    %1071 = vmatprep.subr.bf16.mxu0 0
    %1072 = vmatpush1.bf16.msra.mxu0 %v976
    %1073 = vmatprep.subr.bf16.mxu0 0
    %1074 = vmatpush1.bf16.msra.mxu0 %v977
    %1075 = vmatprep.subr.bf16.mxu0 0
    %1076 = vmatpush1.bf16.msra.mxu0 %v978
    %1077 = vmatprep.subr.bf16.mxu0 0
    %1078 = vmatpush1.bf16.msra.mxu0 %v979
    %1079 = vmatprep.subr.bf16.mxu0 0
    %1080 = vmatpush1.bf16.msra.mxu0 %v980
    %1081 = vmatprep.subr.bf16.mxu0 0
    %1082 = vmatpush1.bf16.msra.mxu0 %v981
    %1083 = vmatprep.subr.bf16.mxu0 0
    %1084 = vmatpush1.bf16.msra.mxu0 %v982
    %1085 = vmatprep.subr.bf16.mxu0 0
    %1086 = vmatpush1.bf16.msra.mxu0 %v983
    %1087 = vmatprep.subr.bf16.mxu0 0
    %1088 = vmatpush1.bf16.msra.mxu0 %v984
    %1089 = vmatprep.mubr.bf16.mxu0 %v753
    %1090 = vmatmul.mubr.bf16.gmra.mrb[0].mxu0 %v752
    %v1091 = vpop.f32.mrb[0].mxu0
    %v1092 = vadd.f32 %v1052, %v1091
    %v1093 = vpop.f32.mrb[0].mxu0
    %v1094 = vpop.f32.mrb[0].mxu0
    %v1095 = vpop.f32.mrb[0].mxu0
    %1096 = vdwg.mxu0
    %v1097 = vtanh.pop %v1092
    %1098 = vst [vmem:[#allocation2] sm:$0xff] %v1097
    // Predicated region
    $region38: #{generator_forward.1} parent=1 // pred_check
      _
    $region39: #{generator_forward.1} parent=1 // pred_check_branch
      %1100 = sbr.rel (0) target = $region41
    $region40: #{generator_forward.1} parent=1 // pred_region
      %s1102 = ssub.s32 128, 128
      %1103 = vsyncadd [#allocation3], %s1102
      %s1105 = sshll.u32 [#allocation2], 4
      %s1106 = int_to_ptr.vmem [resolvable:$true] %s1105
      %1108 = dma.vmem_to_hbm [thread:$0]  %s1106, 128, %s9, [#allocation3]
    $region41: #{generator_forward.1} parent=1 // pred_fallthru
      _
    // Predicated region
    $region42: #{generator_forward.1} parent=1 // pred_check
      _
    $region43: #{generator_forward.1} parent=1 // pred_check_branch
      %1110 = sbr.rel (0) target = $region45
    $region44: #{generator_forward.1} parent=1 // pred_region
      %1111 = dma.done [#allocation3], 128
    $region45: #{generator_forward.1} parent=1 // pred_fallthru
      _
    %1112 = vsyncpa [#allocation3], 1

</llo_original>
